<compile_context>
chip_gen: v5e
topology: v5e:2x2
jax: 0.10.0
libtpu: 0.0.40
codegen_flags: <defaults>
</compile_context>

<pallas_src>
import functools

import jax
import jax.numpy as jnp
from jax import lax
from jax.experimental import pallas as pl
from jax.experimental.pallas import tpu as pltpu

_LANE = 128


def _round_up(v, m):
    return -(-v // m) * m


def _vmem_budget_bytes():
    cap = 64 * 1024 * 1024            # conservative (v7x-sized) fallback
    try:
        info = pltpu.get_tpu_info()
        c = getattr(info, "vmem_capacity_bytes", None)
        if c:
            cap = int(c)
    except Exception:
        pass
    return max(32 * 1024 * 1024, int(0.75 * cap))


def _posconv_kernel(x_ref, w_ref, b_ref, col_ref, o_ref, flat_ref, *, W, TOP, RB, Bt):
    """Depthwise 3x3 conv (+bias, + folded stride-1 residual) for one (batch, channel) block.

    x_ref:    (Bt, N, Cb)   raw token block (row 0 of each image = cls token)
    w_ref:    (9, Cb)       depthwise taps, flat index = kh*3 + kw
    b_ref:    (1, Cb)       bias
    col_ref:  (N, 1)        per-sequence-row column id (-1 for the cls row, else p % W)
    o_ref:    (Bt, N, Cb)   output block
    flat_ref: (TOTAL, Cb)   zero-padded flat feature buffer (VMEM scratch)
    """
    N = x_ref.shape[1]
    Cb = x_ref.shape[2]
    TOTAL = flat_ref.shape[0]
    f32 = jnp.float32

    # Hoisted per-step constants (weights read & cast once; residual folded in f32).
    wf = w_ref[...].astype(f32)                       # (9, Cb)
    wc = wf[4] + 1.0                                  # center tap + stride-1 residual
    bvec = b_ref[...].astype(f32)                     # (1, Cb)

    feat0 = TOP - 1                                   # multiple of 8
    bot0 = feat0 + (N // 8) * 8                       # aligned start of bottom zero region
    ztop = jnp.zeros((feat0, Cb), flat_ref.dtype)
    zbot = jnp.zeros((TOTAL - bot0, Cb), flat_ref.dtype)
    zrow = jnp.zeros((1, Cb), flat_ref.dtype)

    # Zero the pads once per grid step (the per-image copy below never touches them);
    # scratch persists across steps/cores so this must not rely on step 0.
    flat_ref[pl.ds(0, feat0), :] = ztop
    flat_ref[pl.ds(bot0, TOTAL - bot0), :] = zbot

    for bt in range(Bt):                              # batch rows sharing this grid step
        # One aligned copy of the whole token block (cls lands at row feat0), then
        # zero the cls cell so it behaves as part of the top zero padding.
        flat_ref[pl.ds(feat0, N), :] = x_ref[bt]
        flat_ref[pl.ds(feat0, 1), :] = zrow

        cls_row = x_ref[bt, 0:1, :].astype(f32)       # (1, Cb) cls passthrough values

        def band(s0, L):
            # Output sequence rows [s0, s0 + L); flat image position p = row - 1.
            base = feat0 + s0                         # multiple of 8 (s0 multiple of RB)
            col = col_ref[pl.ds(s0, L), :]            # (L, 1)

            def tap(off):
                start = base + off
                if (not isinstance(start, int)) and W % 8 == 0 and off % 8 == 0:
                    start = pl.multiple_of(start, 8)
                return flat_ref[pl.ds(start, L), :].astype(f32)

            # dw = 0 taps (+ bias, + residual-folded center tap).
            acc = tap(0) * wc + bvec
            acc = acc + tap(-W) * wf[1] + tap(W) * wf[7]
            # dw = -1 taps, zeroed where the output column is 0.
            gl = tap(-W - 1) * wf[0] + tap(-1) * wf[3] + tap(W - 1) * wf[6]
            acc = acc + jnp.where(col != 0, gl, 0.0)
            # dw = +1 taps, zeroed where the output column is W - 1.
            gr = tap(-W + 1) * wf[2] + tap(1) * wf[5] + tap(W + 1) * wf[8]
            acc = acc + jnp.where(col != W - 1, gr, 0.0)
            # cls row (col == -1) passes straight through.
            res = jnp.where(col < 0, cls_row, acc)
            o_ref[bt, pl.ds(s0, L), :] = res.astype(o_ref.dtype)

        if N <= 2 * RB:                               # small images: single aligned band
            band(0, N)
        else:                                         # large images: bounded live ranges
            nfull = N // RB

            def body(bi, carry):
                band(bi * RB, RB)
                return carry

            lax.fori_loop(0, nfull, body, 0)
            rem = N - nfull * RB
            if rem:
                band(nfull * RB, rem)


def pos_conv(x, size, weight_hwc, bias, stride=1):
    """JAX/Pallas equivalent of PosConv.forward (stride == 1).

    x:          (B, N, C) tokens with N = 1 + H*W (row 0 is the cls token)
    size:       (H, W)
    weight_hwc: (3, 3, C) depthwise conv weight (PyTorch (C,1,3,3) permuted to (3,3,C))
    bias:       (C,)
    """
    # TODO(synk): stride != 1 variant (strided conv, no residual add) not implemented.
    assert stride == 1, "only stride=1 supported"
    B, N, C = x.shape
    H, W = size
    assert N == 1 + H * W
    HW = H * W
    isz = jnp.dtype(x.dtype).itemsize

    # Flat zero-padded buffer geometry: the token block (cls included) is copied at
    # row TOP-1 (a multiple of 8) so scratch stores, output stores and the dh (=+-W)
    # tap slices are sublane aligned whenever W % 8 == 0.
    TOP = _round_up(W + 8, 8) + 1
    BOT = _round_up(W + 8, 8)
    TOTAL = TOP + HW + BOT

    budget = _vmem_budget_bytes()

    def est_bytes(cb, bt):
        cb_eff = _round_up(cb, _LANE)
        blk = bt * N * cb_eff * isz
        return 4 * blk + TOTAL * cb_eff * isz + 32 * cb_eff * isz + (1 << 20)

    # Channel block: biggest multiple of 128 (<= 512) dividing C that fits the VMEM
    # budget; if C is not a multiple of 128, use one full-width block (legal, and it
    # avoids any host-side pad of x / slice of the output).
    if C % _LANE == 0:
        k = min(4, C // _LANE)
        while k > 1 and not (C % (k * _LANE) == 0 and est_bytes(k * _LANE, 1) <= budget):
            k -= 1
        Cb = k * _LANE
    else:
        Cb = C
    ncb = C // Cb

    # Batch rows per grid step: amortize the ~600-cycle per-step overhead for small
    # H*W, but keep >= 2 grid steps when possible (megacore / 2-TC chips) and keep
    # Bt dividing B so there are no partial batch blocks.
    Bt = max(1, min(B, max(1, 2048 // N)))
    while Bt > 1 and (B % Bt != 0
                      or est_bytes(Cb, Bt) > budget
                      or ncb * (B // Bt) < 2):
        Bt -= 1
    nb = B // Bt

    # Row-band length for the in-kernel accumulation loop (multiple of 8, sized so the
    # band accumulator stays comfortably inside the 64-vreg file).
    RB = max(8, ((16384 // _round_up(Cb, _LANE)) // 8) * 8)

    w9 = weight_hwc.reshape(9, C)
    b1 = bias.reshape(1, C)
    col_id = jnp.concatenate(
        [jnp.full((1,), -1, jnp.int32),
         jnp.arange(HW, dtype=jnp.int32) % W]).reshape(N, 1)

    kernel = functools.partial(_posconv_kernel, W=W, TOP=TOP, RB=RB, Bt=Bt)
    # TODO(synk): input_output_aliases={0: 0} (x is consumed by PosConv in the model)
    # would drop the second (B,N,C) HBM buffer but donates x; left to the caller.
    # TODO(synk): H-tiled halo variant for spatial sizes whose full-image blocks no
    # longer fit the (v7x) VMEM budget.
    return pl.pallas_call(
        kernel,
        out_shape=jax.ShapeDtypeStruct((B, N, C), x.dtype),
        grid=(ncb, nb),
        in_specs=[
            pl.BlockSpec((Bt, N, Cb), lambda cc, bb: (bb, 0, cc)),
            pl.BlockSpec((9, Cb), lambda cc, bb: (0, cc)),
            pl.BlockSpec((1, Cb), lambda cc, bb: (0, cc)),
            pl.BlockSpec((N, 1), lambda cc, bb: (0, 0)),
        ],
        out_specs=pl.BlockSpec((Bt, N, Cb), lambda cc, bb: (bb, 0, cc)),
        scratch_shapes=[pltpu.VMEM((TOTAL, Cb), x.dtype)],
        compiler_params=pltpu.CompilerParams(
            dimension_semantics=("parallel", "parallel"),
            vmem_limit_bytes=budget),
        cost_estimate=pl.CostEstimate(
            flops=18 * B * HW * C,
            transcendentals=0,
            bytes_accessed=2 * B * N * C * isz + 10 * C * isz),
    )(x, w9, b1, col_id)


def _reference(x, size, weight_hwc, bias):
    """Plain-JAX reference (mirrors the PyTorch NCHW depthwise conv + residual)."""
    B, N, C = x.shape
    H, W = size
    cls_token = x[:, :1, :]
    feat_nchw = jnp.transpose(x[:, 1:, :], (0, 2, 1)).reshape(B, C, H, W)
    w_oihw = jnp.transpose(weight_hwc, (2, 0, 1))[:, None, :, :]   # (C,1,3,3)
    y = lax.conv_general_dilated(
        feat_nchw.astype(jnp.float32), w_oihw.astype(jnp.float32),
        window_strides=(1, 1), padding=((1, 1), (1, 1)),
        feature_group_count=C,
        dimension_numbers=("NCHW", "OIHW", "NCHW"),
    ) + bias.astype(jnp.float32)[None, :, None, None]
    y = y + feat_nchw.astype(jnp.float32)
    y = y.reshape(B, C, H * W).transpose(0, 2, 1).astype(x.dtype)
    return jnp.concatenate([cls_token, y], axis=1)


if __name__ == "__main__":
    key = jax.random.PRNGKey(0)

    def run_case(B, C, H, W):
        N = 1 + H * W
        kx, kw, kb = jax.random.split(jax.random.fold_in(key, 1000 * C + 10 * H + B), 3)
        x = jax.random.normal(kx, (B, N, C), dtype=jnp.float32)
        w = jax.random.normal(kw, (3, 3, C), dtype=jnp.float32) * 0.1
        b = jax.random.normal(kb, (C,), dtype=jnp.float32) * 0.1
        out = jax.block_until_ready(pos_conv(x, (H, W), w, b, stride=1))
        ref = jax.block_until_ready(_reference(x, (H, W), w, b))
        assert out.shape == (B, N, C), out.shape
        err = float(jnp.max(jnp.abs(out - ref)))
        assert err < 1e-4, f"case B={B} C={C} H={H} W={W}: max abs err {err}"

    run_case(B=2, C=128, H=8, W=8)     # lane-exact, single aligned band
    run_case(B=2, C=32, H=8, W=8)      # C < 128: full-width channel block, no host pad
    run_case(B=3, C=192, H=7, W=7)     # W % 8 != 0 and C % 128 != 0
    run_case(B=2, C=128, H=24, W=24)   # exercises the row-band fori_loop + remainder
    run_case(B=2, C=512, H=8, W=8)     # multi-lane (Cb = 512) channel block
    print("KERNEL_OK")
</pallas_src>

<mosaic_0001>
module attributes {stable_mosaic.version = 11 : i64} {
  func.func @_posconv_kernel(%arg0: i32, %arg1: i32, %arg2: memref<1x65x128xf32, #tpu.memory_space<vmem>>, %arg3: memref<9x128xf32, #tpu.memory_space<vmem>>, %arg4: memref<1x128xf32, #tpu.memory_space<vmem>>, %arg5: memref<65x1xi32, #tpu.memory_space<vmem>>, %arg6: memref<1x65x128xf32, #tpu.memory_space<vmem>>, %arg7: memref<97x128xf32, #tpu.memory_space<vmem>>) attributes {dimension_semantics = [#tpu.dimension_semantics<parallel>, #tpu.dimension_semantics<parallel>], iteration_bounds = array<i64: 1, 2>, scalar_prefetch = 0 : i64, scratch_operands = 1 : i64, tpu.core_type = #tpu.core_type<tc>, window_params = [{transform_indices = @transform_0, window_bounds = array<i64: 1, 65, 128>}, {transform_indices = @transform_1, window_bounds = array<i64: 9, 128>}, {transform_indices = @transform_2, window_bounds = array<i64: 1, 128>}, {pipeline_mode = #tpu.pipeline_mode<synchronous>, transform_indices = @transform_3, window_bounds = array<i64: 65, 1>}, {transform_indices = @transform_4, window_bounds = array<i64: 1, 65, 128>}]} {
    %c0 = arith.constant 0 : index
    %c0_0 = arith.constant 0 : index
    %0 = vector.load %arg3[%c0, %c0_0] : memref<9x128xf32, #tpu.memory_space<vmem>>, vector<9x128xf32>
    %1 = vector.extract_strided_slice %0 {offsets = [4, 0], sizes = [1, 128], strides = [1, 1]} : vector<9x128xf32> to vector<1x128xf32>
    %2 = vector.shape_cast %1 : vector<1x128xf32> to vector<128xf32>
    %cst = arith.constant 1.000000e+00 : f32
    %3 = vector.broadcast %cst : f32 to vector<128xf32>
    %4 = arith.addf %2, %3 : vector<128xf32>
    %c0_1 = arith.constant 0 : index
    %c0_2 = arith.constant 0 : index
    %5 = vector.load %arg4[%c0_1, %c0_2] : memref<1x128xf32, #tpu.memory_space<vmem>>, vector<1x128xf32>
    %cst_3 = arith.constant 0.000000e+00 : f32
    %6 = vector.broadcast %cst_3 : f32 to vector<16x128xf32>
    %cst_4 = arith.constant 0.000000e+00 : f32
    %7 = vector.broadcast %cst_4 : f32 to vector<17x128xf32>
    %cst_5 = arith.constant 0.000000e+00 : f32
    %8 = vector.broadcast %cst_5 : f32 to vector<1x128xf32>
    %c0_6 = arith.constant 0 : index
    %c0_7 = arith.constant 0 : index
    %9 = vector.load %arg7[%c0_6, %c0_7] : memref<97x128xf32, #tpu.memory_space<vmem>>, vector<16x128xf32>
    tpu.vector_store %arg7[%c0_6, %c0_7], %6 {strides = array<i32>} : memref<97x128xf32, #tpu.memory_space<vmem>>, vector<16x128xf32>,
    %c80 = arith.constant 80 : index
    %c0_8 = arith.constant 0 : index
    %10 = vector.load %arg7[%c80, %c0_8] : memref<97x128xf32, #tpu.memory_space<vmem>>, vector<17x128xf32>
    tpu.vector_store %arg7[%c80, %c0_8], %7 {strides = array<i32>} : memref<97x128xf32, #tpu.memory_space<vmem>>, vector<17x128xf32>,
    %c0_9 = arith.constant 0 : index
    %c0_10 = arith.constant 0 : index
    %c0_11 = arith.constant 0 : index
    %11 = vector.load %arg2[%c0_9, %c0_10, %c0_11] : memref<1x65x128xf32, #tpu.memory_space<vmem>>, vector<1x65x128xf32>
    %12 = vector.shape_cast %11 : vector<1x65x128xf32> to vector<65x128xf32>
    %c16 = arith.constant 16 : index
    %c0_12 = arith.constant 0 : index
    %13 = vector.load %arg7[%c16, %c0_12] : memref<97x128xf32, #tpu.memory_space<vmem>>, vector<65x128xf32>
    tpu.vector_store %arg7[%c16, %c0_12], %12 {strides = array<i32>} : memref<97x128xf32, #tpu.memory_space<vmem>>, vector<65x128xf32>,
    %c16_13 = arith.constant 16 : index
    %c0_14 = arith.constant 0 : index
    %14 = vector.load %arg7[%c16_13, %c0_14] : memref<97x128xf32, #tpu.memory_space<vmem>>, vector<1x128xf32>
    tpu.vector_store %arg7[%c16_13, %c0_14], %8 {strides = array<i32>} : memref<97x128xf32, #tpu.memory_space<vmem>>, vector<1x128xf32>,
    %c0_15 = arith.constant 0 : index
    %c0_16 = arith.constant 0 : index
    %c0_17 = arith.constant 0 : index
    %15 = vector.load %arg2[%c0_15, %c0_16, %c0_17] : memref<1x65x128xf32, #tpu.memory_space<vmem>>, vector<1x1x128xf32>
    %16 = vector.shape_cast %15 : vector<1x1x128xf32> to vector<1x128xf32>
    %c0_18 = arith.constant 0 : index
    %c0_19 = arith.constant 0 : index
    %17 = vector.load %arg5[%c0_18, %c0_19] : memref<65x1xi32, #tpu.memory_space<vmem>>, vector<65x1xi32>
    %c16_20 = arith.constant 16 : index
    %c0_21 = arith.constant 0 : index
    %18 = vector.load %arg7[%c16_20, %c0_21] : memref<97x128xf32, #tpu.memory_space<vmem>>, vector<65x128xf32>
    %19 = vector.shape_cast %4 : vector<128xf32> to vector<1x128xf32>
    %20 = vector.broadcast %19 : vector<1x128xf32> to vector<65x128xf32>
    %21 = arith.mulf %18, %20 : vector<65x128xf32>
    %22 = vector.broadcast %5 : vector<1x128xf32> to vector<65x128xf32>
    %23 = arith.addf %21, %22 : vector<65x128xf32>
    %c8 = arith.constant 8 : index
    %c0_22 = arith.constant 0 : index
    %24 = vector.load %arg7[%c8, %c0_22] : memref<97x128xf32, #tpu.memory_space<vmem>>, vector<65x128xf32>
    %25 = vector.extract_strided_slice %0 {offsets = [1, 0], sizes = [1, 128], strides = [1, 1]} : vector<9x128xf32> to vector<1x128xf32>
    %26 = vector.shape_cast %25 : vector<1x128xf32> to vector<128xf32>
    %27 = vector.shape_cast %26 : vector<128xf32> to vector<1x128xf32>
    %28 = vector.broadcast %27 : vector<1x128xf32> to vector<65x128xf32>
    %29 = arith.mulf %24, %28 : vector<65x128xf32>
    %30 = arith.addf %23, %29 : vector<65x128xf32>
    %c24 = arith.constant 24 : index
    %c0_23 = arith.constant 0 : index
    %31 = vector.load %arg7[%c24, %c0_23] : memref<97x128xf32, #tpu.memory_space<vmem>>, vector<65x128xf32>
    %32 = vector.extract_strided_slice %0 {offsets = [7, 0], sizes = [1, 128], strides = [1, 1]} : vector<9x128xf32> to vector<1x128xf32>
    %33 = vector.shape_cast %32 : vector<1x128xf32> to vector<128xf32>
    %34 = vector.shape_cast %33 : vector<128xf32> to vector<1x128xf32>
    %35 = vector.broadcast %34 : vector<1x128xf32> to vector<65x128xf32>
    %36 = arith.mulf %31, %35 : vector<65x128xf32>
    %37 = arith.addf %30, %36 : vector<65x128xf32>
    %c7 = arith.constant 7 : index
    %c0_24 = arith.constant 0 : index
    %38 = vector.load %arg7[%c7, %c0_24] : memref<97x128xf32, #tpu.memory_space<vmem>>, vector<65x128xf32>
    %39 = vector.extract_strided_slice %0 {offsets = [0, 0], sizes = [1, 128], strides = [1, 1]} : vector<9x128xf32> to vector<1x128xf32>
    %40 = vector.shape_cast %39 : vector<1x128xf32> to vector<128xf32>
    %41 = vector.shape_cast %40 : vector<128xf32> to vector<1x128xf32>
    %42 = vector.broadcast %41 : vector<1x128xf32> to vector<65x128xf32>
    %43 = arith.mulf %38, %42 : vector<65x128xf32>
    %c15 = arith.constant 15 : index
    %c0_25 = arith.constant 0 : index
    %44 = vector.load %arg7[%c15, %c0_25] : memref<97x128xf32, #tpu.memory_space<vmem>>, vector<65x128xf32>
    %45 = vector.extract_strided_slice %0 {offsets = [3, 0], sizes = [1, 128], strides = [1, 1]} : vector<9x128xf32> to vector<1x128xf32>
    %46 = vector.shape_cast %45 : vector<1x128xf32> to vector<128xf32>
    %47 = vector.shape_cast %46 : vector<128xf32> to vector<1x128xf32>
    %48 = vector.broadcast %47 : vector<1x128xf32> to vector<65x128xf32>
    %49 = arith.mulf %44, %48 : vector<65x128xf32>
    %50 = arith.addf %43, %49 : vector<65x128xf32>
    %c23 = arith.constant 23 : index
    %c0_26 = arith.constant 0 : index
    %51 = vector.load %arg7[%c23, %c0_26] : memref<97x128xf32, #tpu.memory_space<vmem>>, vector<65x128xf32>
    %52 = vector.extract_strided_slice %0 {offsets = [6, 0], sizes = [1, 128], strides = [1, 1]} : vector<9x128xf32> to vector<1x128xf32>
    %53 = vector.shape_cast %52 : vector<1x128xf32> to vector<128xf32>
    %54 = vector.shape_cast %53 : vector<128xf32> to vector<1x128xf32>
    %55 = vector.broadcast %54 : vector<1x128xf32> to vector<65x128xf32>
    %56 = arith.mulf %51, %55 : vector<65x128xf32>
    %57 = arith.addf %50, %56 : vector<65x128xf32>
    %c0_i32 = arith.constant 0 : i32
    %58 = vector.broadcast %c0_i32 : i32 to vector<65x1xi32>
    %59 = arith.cmpi ne, %17, %58 : vector<65x1xi32>
    %cst_27 = arith.constant 0.000000e+00 : f32
    %60 = vector.shape_cast %59 : vector<65x1xi1> to vector<65x1xi1>
    %61 = vector.broadcast %60 : vector<65x1xi1> to vector<65x128xi1>
    %62 = vector.broadcast %cst_27 : f32 to vector<65x128xf32>
    %63 = arith.select %61, %57, %62 : vector<65x128xi1>, vector<65x128xf32>
    %64 = arith.addf %37, %63 : vector<65x128xf32>
    %c9 = arith.constant 9 : index
    %c0_28 = arith.constant 0 : index
    %65 = vector.load %arg7[%c9, %c0_28] : memref<97x128xf32, #tpu.memory_space<vmem>>, vector<65x128xf32>
    %66 = vector.extract_strided_slice %0 {offsets = [2, 0], sizes = [1, 128], strides = [1, 1]} : vector<9x128xf32> to vector<1x128xf32>
    %67 = vector.shape_cast %66 : vector<1x128xf32> to vector<128xf32>
    %68 = vector.shape_cast %67 : vector<128xf32> to vector<1x128xf32>
    %69 = vector.broadcast %68 : vector<1x128xf32> to vector<65x128xf32>
    %70 = arith.mulf %65, %69 : vector<65x128xf32>
    %c17 = arith.constant 17 : index
    %c0_29 = arith.constant 0 : index
    %71 = vector.load %arg7[%c17, %c0_29] : memref<97x128xf32, #tpu.memory_space<vmem>>, vector<65x128xf32>
    %72 = vector.extract_strided_slice %0 {offsets = [5, 0], sizes = [1, 128], strides = [1, 1]} : vector<9x128xf32> to vector<1x128xf32>
    %73 = vector.shape_cast %72 : vector<1x128xf32> to vector<128xf32>
    %74 = vector.shape_cast %73 : vector<128xf32> to vector<1x128xf32>
    %75 = vector.broadcast %74 : vector<1x128xf32> to vector<65x128xf32>
    %76 = arith.mulf %71, %75 : vector<65x128xf32>
    %77 = arith.addf %70, %76 : vector<65x128xf32>
    %c25 = arith.constant 25 : index
    %c0_30 = arith.constant 0 : index
    %78 = vector.load %arg7[%c25, %c0_30] : memref<97x128xf32, #tpu.memory_space<vmem>>, vector<65x128xf32>
    %79 = vector.extract_strided_slice %0 {offsets = [8, 0], sizes = [1, 128], strides = [1, 1]} : vector<9x128xf32> to vector<1x128xf32>
    %80 = vector.shape_cast %79 : vector<1x128xf32> to vector<128xf32>
    %81 = vector.shape_cast %80 : vector<128xf32> to vector<1x128xf32>
    %82 = vector.broadcast %81 : vector<1x128xf32> to vector<65x128xf32>
    %83 = arith.mulf %78, %82 : vector<65x128xf32>
    %84 = arith.addf %77, %83 : vector<65x128xf32>
    %c7_i32 = arith.constant 7 : i32
    %85 = vector.broadcast %c7_i32 : i32 to vector<65x1xi32>
    %86 = arith.cmpi ne, %17, %85 : vector<65x1xi32>
    %cst_31 = arith.constant 0.000000e+00 : f32
    %87 = vector.shape_cast %86 : vector<65x1xi1> to vector<65x1xi1>
    %88 = vector.broadcast %87 : vector<65x1xi1> to vector<65x128xi1>
    %89 = vector.broadcast %cst_31 : f32 to vector<65x128xf32>
    %90 = arith.select %88, %84, %89 : vector<65x128xi1>, vector<65x128xf32>
    %91 = arith.addf %64, %90 : vector<65x128xf32>
    %c0_i32_32 = arith.constant 0 : i32
    %92 = vector.broadcast %c0_i32_32 : i32 to vector<65x1xi32>
    %93 = arith.cmpi slt, %17, %92 : vector<65x1xi32>
    %94 = vector.shape_cast %93 : vector<65x1xi1> to vector<65x1xi1>
    %95 = vector.broadcast %94 : vector<65x1xi1> to vector<65x128xi1>
    %96 = vector.shape_cast %16 : vector<1x128xf32> to vector<1x128xf32>
    %97 = vector.broadcast %96 : vector<1x128xf32> to vector<65x128xf32>
    %98 = arith.select %95, %97, %91 : vector<65x128xi1>, vector<65x128xf32>
    %c0_33 = arith.constant 0 : index
    %c0_34 = arith.constant 0 : index
    %c0_35 = arith.constant 0 : index
    %99 = vector.load %arg6[%c0_33, %c0_34, %c0_35] : memref<1x65x128xf32, #tpu.memory_space<vmem>>, vector<1x65x128xf32>
    %100 = vector.shape_cast %99 : vector<1x65x128xf32> to vector<65x128xf32>
    %101 = vector.shape_cast %98 : vector<65x128xf32> to vector<1x65x128xf32>
    tpu.vector_store %arg6[%c0_33, %c0_34, %c0_35], %101 {strides = array<i32>} : memref<1x65x128xf32, #tpu.memory_space<vmem>>, vector<1x65x128xf32>,
    return
  }
  func.func @transform_0(%arg0: i32, %arg1: i32) -> (i32, i32, i32) {
    %c0_i32 = arith.constant 0 : i32
    %c0_i32_0 = arith.constant 0 : i32
    return %arg1, %c0_i32, %arg0 : i32, i32, i32
  }
  func.func @transform_1(%arg0: i32, %arg1: i32) -> (i32, i32) {
    %c0_i32 = arith.constant 0 : i32
    %c0_i32_0 = arith.constant 0 : i32
    return %c0_i32, %arg0 : i32, i32
  }
  func.func @transform_2(%arg0: i32, %arg1: i32) -> (i32, i32) {
    %c0_i32 = arith.constant 0 : i32
    %c0_i32_0 = arith.constant 0 : i32
    return %c0_i32, %arg0 : i32, i32
  }
  func.func @transform_3(%arg0: i32, %arg1: i32) -> (i32, i32) {
    %c0_i32 = arith.constant 0 : i32
    %c0_i32_0 = arith.constant 0 : i32
    %c0_i32_1 = arith.constant 0 : i32
    return %c0_i32, %c0_i32_0 : i32, i32
  }
  func.func @transform_4(%arg0: i32, %arg1: i32) -> (i32, i32, i32) {
    %c0_i32 = arith.constant 0 : i32
    %c0_i32_0 = arith.constant 0 : i32
    return %arg1, %c0_i32, %arg0 : i32, i32, i32
  }
}

</mosaic_0001>

<llo_original>
// kernel: tpu_custom_call.1
$region0: #{tpu_custom_call.1}
  #allocation0 [shape = 'u32[]', space=smem, size = 0x4, offset = 0x4, fixed_abs, tag = 'smem constant byte address 0x4 - core index']
  #allocation1 [shape = 'u32[72,128]{1,0:T(1,128)}', space=vmem, size = 0x9000, scoped, tag = 'internal scratch']
  #allocation2 [shape = 'f32[97,128]{1,0:T(8,128)}', space=vmem, size = 0xd000, scoped, tag = 'scratch operand']
  %s0 = inlined_call_operand.vmem [shape: f32[2,65,128], index: 0, kind: input, shape index: {}]
  %s1 = inlined_call_operand.vmem [shape: f32[9,128], index: 1, kind: input, shape index: {}]
  %s2 = inlined_call_operand.vmem [shape: f32[1,128], index: 2, kind: input, shape index: {}]
  %s3 = inlined_call_operand.vmem [shape: s32[65,1], index: 3, kind: input, shape index: {}]
  %s4 = inlined_call_operand.vmem [shape: f32[2,65,128], index: 4, kind: output, shape index: {}]
  %s5 = sld [smem:[#allocation0]]
  $region49: #{tpu_custom_call.1} parent=0
    _
  %s7 = ssub.s32 1, %s5
  %s8 = scalar_select 0, %s7, %s5
  loop: start=0, step=1, limit=4
  $region2: #{tpu_custom_call.1} parent=0 // loop_pre_header
    _
  $region3: #{tpu_custom_call.1} parent=0 // loop_header
    %s10 = sphi 0, %s14
    %p11 = scmp.ge.s32.totalorder %s10, 4
    %s17 = sphi 0, %s29
    %s18 = sphi 0, %s25
    %s19 = sphi 0, %s17
    %s20 = sphi 0, %s18
    %s21 = sphi 0, %s19
    %s22 = sphi 0, %s20
    %s34 = sphi 0, %s36
    %s37 = sphi 0, %s34
    %s38 = sphi 0, %s37
    %s54 = sphi 0, %s38
    %s60 = sphi 0, %s62
    %s63 = sphi 0, %s60
    %s64 = sphi 0, %s63
    %s80 = sphi 0, %s64
    %s86 = sphi 0, %s88
    %s89 = sphi 0, %s86
    %s90 = sphi 0, %s89
    %s106 = sphi 0, %s90
    %s110 = sphi 0, %s110
    %s112 = sphi 0, %s110
    %s113 = sphi 0, %s112
    %s127 = sphi 0, %s113
    %s135 = sphi 0, %s137
    %s138 = sphi 0, %s135
    %s139 = sphi 0, %s138
    %s155 = sphi 0, %s139
  $region4: #{tpu_custom_call.1} parent=0 // loop_header_branch
    %13 = sbr.rel (%p11) target = $region8
  $region5: #{tpu_custom_call.1} parent=0 // loop_body
    %s15 = ssub.s32 %s10, 1
    %s16 = ssub.s32 %s10, 2
    %s23 = sadd.s32 1, %s18
    %p24 = scmp.ge.s32.totalorder %s23, 2
    %s25 = scalar_select %p24, 0, %s23
    %s26 = sadd.s32 1, %s17
    %s27 = scalar_select %p24, %s26, %s17
    %p28 = scmp.ge.s32.totalorder %s27, 1
    %s29 = scalar_select %p28, 0, %s27
    %s30 = ssub.s32 %s18, %s25
    %s31 = ssub.s32 %s17, %s29
    %s32 = sor.u32 %s30, %s31
    %p33 = scmp.eq.s32.totalorder %s32, 0
    %s35 = sadd.s32 %s34, 1
    %s36 = scalar_select %p33, %s34, %s35
    %p39 = pneg %p33
    %p40 = scmp.eq.s32.totalorder %s10, 1
    %p41 = por %p39, %p40
    %p42 = scmp.ne.s32.totalorder %s34, %s37
    %p43 = scmp.eq.s32.totalorder %s10, 0
    %p44 = por %p42, %p43
    %p45 = scmp.ne.s32.totalorder %s34, %s37
    %p46 = scmp.eq.s32.totalorder %s15, 1
    %p47 = por %p45, %p46
    %p48 = scmp.ne.s32.totalorder %s37, %s38
    %p49 = scmp.eq.s32.totalorder %s15, 0
    %p50 = por %p48, %p49
    %p51 = scmp.ne.s32.totalorder %s37, %s38
    %p52 = scmp.eq.s32.totalorder %s16, 1
    %p53 = por %p51, %p52
    %p55 = scmp.ne.s32.totalorder %s38, %s54
    %p56 = scmp.eq.s32.totalorder %s16, 0
    %p57 = por %p55, %p56
    %s58 = ssub.s32 %s17, %s29
    %p59 = scmp.eq.s32.totalorder %s58, 0
    %s61 = sadd.s32 %s60, 1
    %s62 = scalar_select %p59, %s60, %s61
    %p65 = pneg %p59
    %p66 = scmp.eq.s32.totalorder %s10, 1
    %p67 = por %p65, %p66
    %p68 = scmp.ne.s32.totalorder %s60, %s63
    %p69 = scmp.eq.s32.totalorder %s10, 0
    %p70 = por %p68, %p69
    %p71 = scmp.ne.s32.totalorder %s60, %s63
    %p72 = scmp.eq.s32.totalorder %s15, 1
    %p73 = por %p71, %p72
    %p74 = scmp.ne.s32.totalorder %s63, %s64
    %p75 = scmp.eq.s32.totalorder %s15, 0
    %p76 = por %p74, %p75
    %p77 = scmp.ne.s32.totalorder %s63, %s64
    %p78 = scmp.eq.s32.totalorder %s16, 1
    %p79 = por %p77, %p78
    %p81 = scmp.ne.s32.totalorder %s64, %s80
    %p82 = scmp.eq.s32.totalorder %s16, 0
    %p83 = por %p81, %p82
    %s84 = ssub.s32 %s17, %s29
    %p85 = scmp.eq.s32.totalorder %s84, 0
    %s87 = sadd.s32 %s86, 1
    %s88 = scalar_select %p85, %s86, %s87
    %p91 = pneg %p85
    %p92 = scmp.eq.s32.totalorder %s10, 1
    %p93 = por %p91, %p92
    %p94 = scmp.ne.s32.totalorder %s86, %s89
    %p95 = scmp.eq.s32.totalorder %s10, 0
    %p96 = por %p94, %p95
    %p97 = scmp.ne.s32.totalorder %s86, %s89
    %p98 = scmp.eq.s32.totalorder %s15, 1
    %p99 = por %p97, %p98
    %p100 = scmp.ne.s32.totalorder %s89, %s90
    %p101 = scmp.eq.s32.totalorder %s15, 0
    %p102 = por %p100, %p101
    %p103 = scmp.ne.s32.totalorder %s89, %s90
    %p104 = scmp.eq.s32.totalorder %s16, 1
    %p105 = por %p103, %p104
    %p107 = scmp.ne.s32.totalorder %s90, %s106
    %p108 = scmp.eq.s32.totalorder %s16, 0
    %p109 = por %p107, %p108
    %s111 = sadd.s32 %s110, 1
    %p114 = scmp.eq.s32.totalorder %s10, 1
    %p115 = scmp.ne.s32.totalorder %s110, %s112
    %p116 = scmp.eq.s32.totalorder %s10, 0
    %p117 = por %p115, %p116
    %p118 = scmp.ne.s32.totalorder %s110, %s112
    %p119 = scmp.eq.s32.totalorder %s15, 1
    %p120 = por %p118, %p119
    %p121 = scmp.ne.s32.totalorder %s112, %s113
    %p122 = scmp.eq.s32.totalorder %s15, 0
    %p123 = por %p121, %p122
    %p124 = scmp.ne.s32.totalorder %s112, %s113
    %p125 = scmp.eq.s32.totalorder %s16, 1
    %p126 = por %p124, %p125
    %p128 = scmp.ne.s32.totalorder %s113, %s127
    %p129 = scmp.eq.s32.totalorder %s16, 0
    %p130 = por %p128, %p129
    %s131 = ssub.s32 %s18, %s25
    %s132 = ssub.s32 %s17, %s29
    %s133 = sor.u32 %s131, %s132
    %p134 = scmp.eq.s32.totalorder %s133, 0
    %s136 = sadd.s32 %s135, 1
    %s137 = scalar_select %p134, %s135, %s136
    %p140 = pneg %p134
    %p141 = scmp.eq.s32.totalorder %s10, 1
    %p142 = por %p140, %p141
    %p143 = scmp.ne.s32.totalorder %s135, %s138
    %p144 = scmp.eq.s32.totalorder %s10, 0
    %p145 = por %p143, %p144
    %p146 = scmp.ne.s32.totalorder %s135, %s138
    %p147 = scmp.eq.s32.totalorder %s15, 1
    %p148 = por %p146, %p147
    %p149 = scmp.ne.s32.totalorder %s138, %s139
    %p150 = scmp.eq.s32.totalorder %s15, 0
    %p151 = por %p149, %p150
    %p152 = scmp.ne.s32.totalorder %s138, %s139
    %p153 = scmp.eq.s32.totalorder %s16, 1
    %p154 = por %p152, %p153
    %p156 = scmp.ne.s32.totalorder %s139, %s155
    %p157 = scmp.eq.s32.totalorder %s16, 0
    %p158 = por %p156, %p157
    %p159 = scmp.le.s32.totalorder 1, %s10
    %p160 = scmp.lt.s32.totalorder %s10, 3
    %p161 = pnand %p159, %p160
    %p162 = pneg %p161
    // Predicated region
    $region9: #{tpu_custom_call.1} parent=5 // pred_check
      _
    $region10: #{tpu_custom_call.1} parent=5 // pred_check_branch
      %164 = sbr.rel (%p161) target = $region12
    $region11: #{tpu_custom_call.1} parent=5 // pred_region
      %s165 = ssub.s32 %s10, 1
      // Predicated region
      $region13: #{tpu_custom_call.1} parent=11 // pred_check
        %p166 = pneg %p76
      $region14: #{tpu_custom_call.1} parent=11 // pred_check_branch
        %168 = sbr.rel (%p166) target = $region16
      $region15: #{tpu_custom_call.1} parent=11 // pred_region
        %p169 = scmp.lt.s32.totalorder %s19, 0
        %s170 = scalar_select %p169, %s19, 0
        %s171 = smul.addr %s170, 8
        %s172 = scalar_lea.vmem %s1, %s171
      $region16: #{tpu_custom_call.1} parent=11 // pred_fallthru
        _
      // Predicated region
      $region17: #{tpu_custom_call.1} parent=11 // pred_check
        %p173 = pneg %p102
      $region18: #{tpu_custom_call.1} parent=11 // pred_check_branch
        %175 = sbr.rel (%p173) target = $region20
      $region19: #{tpu_custom_call.1} parent=11 // pred_region
        %p176 = scmp.lt.s32.totalorder %s19, 0
        %s177 = scalar_select %p176, %s19, 0
        %s178 = scalar_lea.vmem %s2, %s177
      $region20: #{tpu_custom_call.1} parent=11 // pred_fallthru
        _
      // Predicated region
      $region21: #{tpu_custom_call.1} parent=11 // pred_check
        %p179 = pneg %p123
      $region22: #{tpu_custom_call.1} parent=11 // pred_check_branch
        %181 = sbr.rel (%p179) target = $region24
      $region23: #{tpu_custom_call.1} parent=11 // pred_region
        _
      $region24: #{tpu_custom_call.1} parent=11 // pred_fallthru
        _
    $region12: #{tpu_custom_call.1} parent=5 // pred_fallthru
      _
    %p182 = scmp.lt.s32.totalorder %s10, 2
    // Predicated region
    $region25: #{tpu_custom_call.1} parent=5 // pred_check
      %p183 = pneg %p182
    $region26: #{tpu_custom_call.1} parent=5 // pred_check_branch
      %185 = sbr.rel (%p183) target = $region28
    $region27: #{tpu_custom_call.1} parent=5 // pred_region
      // Predicated region
      $region29: #{tpu_custom_call.1} parent=27 // pred_check
        %p186 = pneg %p44
      $region30: #{tpu_custom_call.1} parent=27 // pred_check_branch
        %188 = sbr.rel (%p186) target = $region32
      $region31: #{tpu_custom_call.1} parent=27 // pred_region
        %p189 = scmp.lt.s32.totalorder %s18, 1
        %s190 = scalar_select %p189, %s18, 1
        %p191 = scmp.lt.s32.totalorder %s17, 0
        %s192 = scalar_select %p191, %s17, 0
        %s193 = smul.addr %s190, 9
        %s194 = sadd.s32 %s192, %s193
        %s195 = smul.addr %s194, 8
        %s196 = scalar_lea.vmem %s0, %s195
      $region32: #{tpu_custom_call.1} parent=27 // pred_fallthru
        _
    $region28: #{tpu_custom_call.1} parent=5 // pred_fallthru
      _
    %p197 = scmp.le.s32.totalorder 1, %s10
    %p198 = scmp.lt.s32.totalorder %s10, 3
    %p199 = pnand %p197, %p198
    %p200 = pneg %p199
    // Predicated region
    $region33: #{tpu_custom_call.1} parent=5 // pred_check
      _
    $region34: #{tpu_custom_call.1} parent=5 // pred_check_branch
      %202 = sbr.rel (%p199) target = $region36
    $region35: #{tpu_custom_call.1} parent=5 // pred_region
      %s203 = ssub.s32 %s10, 1
      %p204 = scmp.lt.s32.totalorder %s20, 1
      %s205 = scalar_select %p204, %s20, 1
      %p206 = scmp.lt.s32.totalorder %s19, 0
      %s207 = scalar_select %p206, %s19, 0
      %s208 = smul.addr %s205, 9
      %s209 = sadd.s32 %s207, %s208
      %s210 = smul.addr %s209, 8
      %s211 = scalar_lea.vmem %s0, %s210
      %p212 = pneg %p50
      %p213 = pneg %p47
      %p214 = scmp.lt.s32.totalorder %s19, 0
      %s215 = scalar_select %p214, %s19, 0
      %s216 = smul.addr %s215, 8
      %s217 = scalar_lea.vmem %s1, %s216
      %p218 = pneg %p76
      %p219 = pneg %p73
      %p220 = scmp.lt.s32.totalorder %s19, 0
      %s221 = scalar_select %p220, %s19, 0
      %s222 = scalar_lea.vmem %s2, %s221
      %p223 = pneg %p102
      %p224 = pneg %p99
      %p225 = pneg %p123
      %p226 = pneg %p120
      %p227 = pneg %p151
      %p228 = pneg %p148
      %p229 = scmp.lt.s32.totalorder %s20, 1
      %s230 = scalar_select %p229, %s20, 1
      %p231 = scmp.lt.s32.totalorder %s19, 0
      %s232 = scalar_select %p231, %s19, 0
      %s233 = smul.addr %s230, 9
      %s234 = sadd.s32 %s232, %s233
      %s235 = smul.addr %s234, 8
      %s236 = scalar_lea.vmem %s4, %s235
      %p237 = scmp.lt.s32.totalorder %s20, 1
      %s238 = scalar_select %p237, %s20, 1
      %p239 = scmp.lt.s32.totalorder %s19, 0
      %s240 = scalar_select %p239, %s19, 0
      %s241 = smul.addr %s238, 9
      %s242 = sadd.s32 %s240, %s241
      %s243 = smul.addr %s242, 8
      %s244 = scalar_lea.vmem %s0, %s243
      %p245 = scmp.lt.s32.totalorder %s19, 0
      %s246 = scalar_select %p245, %s19, 0
      %s247 = smul.addr %s246, 8
      %s248 = scalar_lea.vmem %s1, %s247
      %p249 = scmp.lt.s32.totalorder %s19, 0
      %s250 = scalar_select %p249, %s19, 0
      %s251 = scalar_lea.vmem %s2, %s250
      %p252 = scmp.lt.s32.totalorder %s20, 1
      %s253 = scalar_select %p252, %s20, 1
      %p254 = scmp.lt.s32.totalorder %s19, 0
      %s255 = scalar_select %p254, %s19, 0
      %s256 = smul.addr %s253, 9
      %s257 = sadd.s32 %s255, %s256
      %s258 = smul.addr %s257, 8
      %s259 = scalar_lea.vmem %s4, %s258
      %v260 = vld [vmem:[%s248] sm:$0xff]
      %v261 = vld [vmem:[%s248 + $0x8] sm:$0x1]
      %v262 = vadd.f32 %v260, 1.0
      %v263 = vld [vmem:[%s251] sm:$0x1]
      %264 = vst [vmem:[#allocation2] sm:$0xff] 0.0
      %265 = vst [vmem:[#allocation2 + $0x8] sm:$0xff] 0.0
      %266 = vst [vmem:[#allocation2 + $0x50] sm:$0xff] 0.0
      %267 = vst [vmem:[#allocation2 + $0x58] sm:$0xff] 0.0
      %268 = vst [vmem:[#allocation2 + $0x60] sm:$0x1] 0.0
      %v269 = vld [vmem:[%s244] sm:$0xff]
      %v270 = vld [vmem:[%s244 + $0x8] sm:$0xff]
      %v271 = vld [vmem:[%s244 + $0x10] sm:$0xff]
      %v272 = vld [vmem:[%s244 + $0x18] sm:$0xff]
      %v273 = vld [vmem:[%s244 + $0x20] sm:$0xff]
      %v274 = vld [vmem:[%s244 + $0x28] sm:$0xff]
      %v275 = vld [vmem:[%s244 + $0x30] sm:$0xff]
      %v276 = vld [vmem:[%s244 + $0x38] sm:$0xff]
      %v277 = vld [vmem:[%s244 + $0x40] sm:$0x1]
      %278 = vst [vmem:[#allocation2 + $0x10] sm:$0xff] %v269
      %279 = vst [vmem:[#allocation2 + $0x18] sm:$0xff] %v270
      %280 = vst [vmem:[#allocation2 + $0x20] sm:$0xff] %v271
      %281 = vst [vmem:[#allocation2 + $0x28] sm:$0xff] %v272
      %282 = vst [vmem:[#allocation2 + $0x30] sm:$0xff] %v273
      %283 = vst [vmem:[#allocation2 + $0x38] sm:$0xff] %v274
      %284 = vst [vmem:[#allocation2 + $0x40] sm:$0xff] %v275
      %285 = vst [vmem:[#allocation2 + $0x48] sm:$0xff] %v276
      %286 = vst [vmem:[#allocation2 + $0x50] sm:$0x1] %v277
      %287 = vst [vmem:[#allocation2 + $0x10] sm:$0x1] 0.0
      %v288 = vld [vmem:[%s244] sm:$0x1]
      %v289 = vld [vmem:[%s3] sm:$0xff]
      %v290 = vld [vmem:[%s3 + $0x8] sm:$0xff]
      %v291 = vld [vmem:[%s3 + $0x10] sm:$0xff]
      %v292 = vld [vmem:[%s3 + $0x18] sm:$0xff]
      %v293 = vld [vmem:[%s3 + $0x20] sm:$0xff]
      %v294 = vld [vmem:[%s3 + $0x28] sm:$0xff]
      %v295 = vld [vmem:[%s3 + $0x30] sm:$0xff]
      %v296 = vld [vmem:[%s3 + $0x38] sm:$0xff]
      %v297 = vld [vmem:[%s3 + $0x40] sm:$0x1]
      %v298 = vld [vmem:[#allocation2 + $0x10] sm:$0xff]
      %v299 = vld [vmem:[#allocation2 + $0x18] sm:$0xff]
      %v300 = vld [vmem:[#allocation2 + $0x20] sm:$0xff]
      %v301 = vld [vmem:[#allocation2 + $0x28] sm:$0xff]
      %v302 = vld [vmem:[#allocation2 + $0x30] sm:$0xff]
      %v303 = vld [vmem:[#allocation2 + $0x38] sm:$0xff]
      %v304 = vld [vmem:[#allocation2 + $0x40] sm:$0xff]
      %v305 = vld [vmem:[#allocation2 + $0x48] sm:$0xff]
      %v306 = vld [vmem:[#allocation2 + $0x50] sm:$0x1]
      %v307 = vperm.slane %v262, 4
      %v308 = vmul.f32 %v298, %v307
      %v309 = vmul.f32 %v299, %v307
      %v310 = vmul.f32 %v300, %v307
      %v311 = vmul.f32 %v301, %v307
      %v312 = vmul.f32 %v302, %v307
      %v313 = vmul.f32 %v303, %v307
      %v314 = vmul.f32 %v304, %v307
      %v315 = vmul.f32 %v305, %v307
      %v316 = vmul.f32 %v306, %v307
      %v318 = vperm.slane %v263, 0
      %v320 = vadd.f32 %v308, %v318
      %v321 = vadd.f32 %v309, %v318
      %v322 = vadd.f32 %v310, %v318
      %v323 = vadd.f32 %v311, %v318
      %v324 = vadd.f32 %v312, %v318
      %v325 = vadd.f32 %v313, %v318
      %v326 = vadd.f32 %v314, %v318
      %v327 = vadd.f32 %v315, %v318
      %v328 = vadd.f32 %v316, %v318
      %v329 = vld [vmem:[#allocation2 + $0x8] sm:$0xff]
      %v330 = vld [vmem:[#allocation2 + $0x48] sm:$0x1]
      %v331 = vperm.slane %v260, 1
      %v332 = vmul.f32 %v329, %v331
      %v333 = vmul.f32 %v298, %v331
      %v334 = vmul.f32 %v299, %v331
      %v335 = vmul.f32 %v300, %v331
      %v336 = vmul.f32 %v301, %v331
      %v337 = vmul.f32 %v302, %v331
      %v338 = vmul.f32 %v303, %v331
      %v339 = vmul.f32 %v304, %v331
      %v340 = vmul.f32 %v330, %v331
      %v341 = vadd.f32 %v320, %v332
      %v342 = vadd.f32 %v321, %v333
      %v343 = vadd.f32 %v322, %v334
      %v344 = vadd.f32 %v323, %v335
      %v345 = vadd.f32 %v324, %v336
      %v346 = vadd.f32 %v325, %v337
      %v347 = vadd.f32 %v326, %v338
      %v348 = vadd.f32 %v327, %v339
      %v349 = vadd.f32 %v328, %v340
      %v350 = vld [vmem:[#allocation2 + $0x50] sm:$0xff]
      %v351 = vld [vmem:[#allocation2 + $0x58] sm:$0x1]
      %v352 = vperm.slane %v260, 7
      %v353 = vmul.f32 %v299, %v352
      %v354 = vmul.f32 %v300, %v352
      %v355 = vmul.f32 %v301, %v352
      %v356 = vmul.f32 %v302, %v352
      %v357 = vmul.f32 %v303, %v352
      %v358 = vmul.f32 %v304, %v352
      %v359 = vmul.f32 %v305, %v352
      %v360 = vmul.f32 %v350, %v352
      %v361 = vmul.f32 %v351, %v352
      %v362 = vadd.f32 %v341, %v353
      %v363 = vadd.f32 %v342, %v354
      %v364 = vadd.f32 %v343, %v355
      %v365 = vadd.f32 %v344, %v356
      %v366 = vadd.f32 %v345, %v357
      %v367 = vadd.f32 %v346, %v358
      %v368 = vadd.f32 %v347, %v359
      %v369 = vadd.f32 %v348, %v360
      %v370 = vadd.f32 %v349, %v361
      %v371 = vld [vmem:[#allocation2 + $0x7] sm:$0xff]
      %v372 = vld [vmem:[#allocation2 + $0xf] sm:$0xff]
      %v373 = vld [vmem:[#allocation2 + $0x17] sm:$0xff]
      %v374 = vld [vmem:[#allocation2 + $0x1f] sm:$0xff]
      %v375 = vld [vmem:[#allocation2 + $0x27] sm:$0xff]
      %v376 = vld [vmem:[#allocation2 + $0x2f] sm:$0xff]
      %v377 = vld [vmem:[#allocation2 + $0x37] sm:$0xff]
      %v378 = vld [vmem:[#allocation2 + $0x3f] sm:$0xff]
      %v379 = vld [vmem:[#allocation2 + $0x47] sm:$0x1]
      %v380 = vperm.slane %v260, 0
      %v381 = vmul.f32 %v371, %v380
      %v382 = vmul.f32 %v372, %v380
      %v383 = vmul.f32 %v373, %v380
      %v384 = vmul.f32 %v374, %v380
      %v385 = vmul.f32 %v375, %v380
      %v386 = vmul.f32 %v376, %v380
      %v387 = vmul.f32 %v377, %v380
      %v388 = vmul.f32 %v378, %v380
      %v389 = vmul.f32 %v379, %v380
      %v390 = vld [vmem:[#allocation2 + $0x47] sm:$0xff]
      %v391 = vld [vmem:[#allocation2 + $0x4f] sm:$0x1]
      %v392 = vperm.slane %v260, 3
      %v393 = vmul.f32 %v372, %v392
      %v394 = vmul.f32 %v373, %v392
      %v395 = vmul.f32 %v374, %v392
      %v396 = vmul.f32 %v375, %v392
      %v397 = vmul.f32 %v376, %v392
      %v398 = vmul.f32 %v377, %v392
      %v399 = vmul.f32 %v378, %v392
      %v400 = vmul.f32 %v390, %v392
      %v401 = vmul.f32 %v391, %v392
      %v402 = vadd.f32 %v381, %v393
      %v403 = vadd.f32 %v382, %v394
      %v404 = vadd.f32 %v383, %v395
      %v405 = vadd.f32 %v384, %v396
      %v406 = vadd.f32 %v385, %v397
      %v407 = vadd.f32 %v386, %v398
      %v408 = vadd.f32 %v387, %v399
      %v409 = vadd.f32 %v388, %v400
      %v410 = vadd.f32 %v389, %v401
      %v411 = vld [vmem:[#allocation2 + $0x4f] sm:$0xff]
      %v412 = vld [vmem:[#allocation2 + $0x57] sm:$0x1]
      %v413 = vperm.slane %v260, 6
      %v414 = vmul.f32 %v373, %v413
      %v415 = vmul.f32 %v374, %v413
      %v416 = vmul.f32 %v375, %v413
      %v417 = vmul.f32 %v376, %v413
      %v418 = vmul.f32 %v377, %v413
      %v419 = vmul.f32 %v378, %v413
      %v420 = vmul.f32 %v390, %v413
      %v421 = vmul.f32 %v411, %v413
      %v422 = vmul.f32 %v412, %v413
      %v423 = vadd.f32 %v402, %v414
      %v424 = vadd.f32 %v403, %v415
      %v425 = vadd.f32 %v404, %v416
      %v426 = vadd.f32 %v405, %v417
      %v427 = vadd.f32 %v406, %v418
      %v428 = vadd.f32 %v407, %v419
      %v429 = vadd.f32 %v408, %v420
      %v430 = vadd.f32 %v409, %v421
      %v431 = vadd.f32 %v410, %v422
      %vm432 = vcmp.ne.s32.totalorder %v289, 0
      %vm433 = vcmp.ne.s32.totalorder %v290, 0
      %vm434 = vcmp.ne.s32.totalorder %v291, 0
      %vm435 = vcmp.ne.s32.totalorder %v292, 0
      %vm436 = vcmp.ne.s32.totalorder %v293, 0
      %vm437 = vcmp.ne.s32.totalorder %v294, 0
      %vm438 = vcmp.ne.s32.totalorder %v295, 0
      %vm439 = vcmp.ne.s32.totalorder %v296, 0
      %vm440 = vcmp.ne.s32.totalorder %v297, 0
      %v441 = vsel %vm432, 1, 0
      %v442 = vsel %vm433, 1, 0
      %v443 = vsel %vm434, 1, 0
      %v444 = vsel %vm435, 1, 0
      %v445 = vsel %vm436, 1, 0
      %v446 = vsel %vm437, 1, 0
      %v447 = vsel %vm438, 1, 0
      %v448 = vsel %vm439, 1, 0
      %v449 = vsel %vm440, 1, 0
      %450 = vset.pattern.permute.xlu0 0
      %451 = vperm.xlu0 %450, %v441
      %v452 = vpop.permute.xlu0 %451
      %453 = vset.pattern.permute.xlu0 0
      %454 = vperm.xlu0 %453, %v442
      %v455 = vpop.permute.xlu0 %454
      %456 = vset.pattern.permute.xlu0 0
      %457 = vperm.xlu0 %456, %v443
      %v458 = vpop.permute.xlu0 %457
      %459 = vset.pattern.permute.xlu0 0
      %460 = vperm.xlu0 %459, %v444
      %v461 = vpop.permute.xlu0 %460
      %462 = vset.pattern.permute.xlu0 0
      %463 = vperm.xlu0 %462, %v445
      %v464 = vpop.permute.xlu0 %463
      %465 = vset.pattern.permute.xlu0 0
      %466 = vperm.xlu0 %465, %v446
      %v467 = vpop.permute.xlu0 %466
      %468 = vset.pattern.permute.xlu0 0
      %469 = vperm.xlu0 %468, %v447
      %v470 = vpop.permute.xlu0 %469
      %471 = vset.pattern.permute.xlu0 0
      %472 = vperm.xlu0 %471, %v448
      %v473 = vpop.permute.xlu0 %472
      %474 = vset.pattern.permute.xlu0 0
      %475 = vperm.xlu0 %474, %v449
      %v476 = vpop.permute.xlu0 %475
      %vm477 = vcmp.eq.s32.totalorder %v452, 1
      %vm478 = vcmp.eq.s32.totalorder %v455, 1
      %vm479 = vcmp.eq.s32.totalorder %v458, 1
      %vm480 = vcmp.eq.s32.totalorder %v461, 1
      %vm481 = vcmp.eq.s32.totalorder %v464, 1
      %vm482 = vcmp.eq.s32.totalorder %v467, 1
      %vm483 = vcmp.eq.s32.totalorder %v470, 1
      %vm484 = vcmp.eq.s32.totalorder %v473, 1
      %vm485 = vcmp.eq.s32.totalorder %v476, 1
      %v486 = vsel %vm477, %v423, 0.0
      %v487 = vsel %vm478, %v424, 0.0
      %v488 = vsel %vm479, %v425, 0.0
      %v489 = vsel %vm480, %v426, 0.0
      %v490 = vsel %vm481, %v427, 0.0
      %v491 = vsel %vm482, %v428, 0.0
      %v492 = vsel %vm483, %v429, 0.0
      %v493 = vsel %vm484, %v430, 0.0
      %v494 = vsel %vm485, %v431, 0.0
      %v495 = vadd.f32 %v362, %v486
      %v496 = vadd.f32 %v363, %v487
      %v497 = vadd.f32 %v364, %v488
      %v498 = vadd.f32 %v365, %v489
      %v499 = vadd.f32 %v366, %v490
      %v500 = vadd.f32 %v367, %v491
      %v501 = vadd.f32 %v368, %v492
      %v502 = vadd.f32 %v369, %v493
      %v503 = vadd.f32 %v370, %v494
      %v504 = vld [vmem:[#allocation2 + $0x9] sm:$0xff]
      %v505 = vld [vmem:[#allocation2 + $0x11] sm:$0xff]
      %v506 = vld [vmem:[#allocation2 + $0x19] sm:$0xff]
      %v507 = vld [vmem:[#allocation2 + $0x21] sm:$0xff]
      %v508 = vld [vmem:[#allocation2 + $0x29] sm:$0xff]
      %v509 = vld [vmem:[#allocation2 + $0x31] sm:$0xff]
      %v510 = vld [vmem:[#allocation2 + $0x39] sm:$0xff]
      %v511 = vld [vmem:[#allocation2 + $0x41] sm:$0xff]
      %v512 = vld [vmem:[#allocation2 + $0x49] sm:$0x1]
      %v513 = vperm.slane %v260, 2
      %v514 = vmul.f32 %v504, %v513
      %v515 = vmul.f32 %v505, %v513
      %v516 = vmul.f32 %v506, %v513
      %v517 = vmul.f32 %v507, %v513
      %v518 = vmul.f32 %v508, %v513
      %v519 = vmul.f32 %v509, %v513
      %v520 = vmul.f32 %v510, %v513
      %v521 = vmul.f32 %v511, %v513
      %v522 = vmul.f32 %v512, %v513
      %v523 = vld [vmem:[#allocation2 + $0x49] sm:$0xff]
      %v524 = vld [vmem:[#allocation2 + $0x51] sm:$0x1]
      %v525 = vperm.slane %v260, 5
      %v526 = vmul.f32 %v505, %v525
      %v527 = vmul.f32 %v506, %v525
      %v528 = vmul.f32 %v507, %v525
      %v529 = vmul.f32 %v508, %v525
      %v530 = vmul.f32 %v509, %v525
      %v531 = vmul.f32 %v510, %v525
      %v532 = vmul.f32 %v511, %v525
      %v533 = vmul.f32 %v523, %v525
      %v534 = vmul.f32 %v524, %v525
      %v535 = vadd.f32 %v514, %v526
      %v536 = vadd.f32 %v515, %v527
      %v537 = vadd.f32 %v516, %v528
      %v538 = vadd.f32 %v517, %v529
      %v539 = vadd.f32 %v518, %v530
      %v540 = vadd.f32 %v519, %v531
      %v541 = vadd.f32 %v520, %v532
      %v542 = vadd.f32 %v521, %v533
      %v543 = vadd.f32 %v522, %v534
      %v544 = vld [vmem:[#allocation2 + $0x51] sm:$0xff]
      %v545 = vld [vmem:[#allocation2 + $0x59] sm:$0x1]
      %v546 = vperm.slane %v261, 0
      %v547 = vmul.f32 %v506, %v546
      %v548 = vmul.f32 %v507, %v546
      %v549 = vmul.f32 %v508, %v546
      %v550 = vmul.f32 %v509, %v546
      %v551 = vmul.f32 %v510, %v546
      %v552 = vmul.f32 %v511, %v546
      %v553 = vmul.f32 %v523, %v546
      %v554 = vmul.f32 %v544, %v546
      %v555 = vmul.f32 %v545, %v546
      %v556 = vadd.f32 %v535, %v547
      %v557 = vadd.f32 %v536, %v548
      %v558 = vadd.f32 %v537, %v549
      %v559 = vadd.f32 %v538, %v550
      %v560 = vadd.f32 %v539, %v551
      %v561 = vadd.f32 %v540, %v552
      %v562 = vadd.f32 %v541, %v553
      %v563 = vadd.f32 %v542, %v554
      %v564 = vadd.f32 %v543, %v555
      %vm565 = vcmp.ne.s32.totalorder %v289, 7
      %vm566 = vcmp.ne.s32.totalorder %v290, 7
      %vm567 = vcmp.ne.s32.totalorder %v291, 7
      %vm568 = vcmp.ne.s32.totalorder %v292, 7
      %vm569 = vcmp.ne.s32.totalorder %v293, 7
      %vm570 = vcmp.ne.s32.totalorder %v294, 7
      %vm571 = vcmp.ne.s32.totalorder %v295, 7
      %vm572 = vcmp.ne.s32.totalorder %v296, 7
      %vm573 = vcmp.ne.s32.totalorder %v297, 7
      %v574 = vsel %vm565, 1, 0
      %v575 = vsel %vm566, 1, 0
      %v576 = vsel %vm567, 1, 0
      %v577 = vsel %vm568, 1, 0
      %v578 = vsel %vm569, 1, 0
      %v579 = vsel %vm570, 1, 0
      %v580 = vsel %vm571, 1, 0
      %v581 = vsel %vm572, 1, 0
      %v582 = vsel %vm573, 1, 0
      %583 = vset.pattern.permute.xlu0 0
      %584 = vperm.xlu0 %583, %v574
      %v585 = vpop.permute.xlu0 %584
      %586 = vset.pattern.permute.xlu0 0
      %587 = vperm.xlu0 %586, %v575
      %v588 = vpop.permute.xlu0 %587
      %589 = vset.pattern.permute.xlu0 0
      %590 = vperm.xlu0 %589, %v576
      %v591 = vpop.permute.xlu0 %590
      %592 = vset.pattern.permute.xlu0 0
      %593 = vperm.xlu0 %592, %v577
      %v594 = vpop.permute.xlu0 %593
      %595 = vset.pattern.permute.xlu0 0
      %596 = vperm.xlu0 %595, %v578
      %v597 = vpop.permute.xlu0 %596
      %598 = vset.pattern.permute.xlu0 0
      %599 = vperm.xlu0 %598, %v579
      %v600 = vpop.permute.xlu0 %599
      %601 = vset.pattern.permute.xlu0 0
      %602 = vperm.xlu0 %601, %v580
      %v603 = vpop.permute.xlu0 %602
      %604 = vset.pattern.permute.xlu0 0
      %605 = vperm.xlu0 %604, %v581
      %v606 = vpop.permute.xlu0 %605
      %607 = vset.pattern.permute.xlu0 0
      %608 = vperm.xlu0 %607, %v582
      %v609 = vpop.permute.xlu0 %608
      %vm610 = vcmp.eq.s32.totalorder %v585, 1
      %vm611 = vcmp.eq.s32.totalorder %v588, 1
      %vm612 = vcmp.eq.s32.totalorder %v591, 1
      %vm613 = vcmp.eq.s32.totalorder %v594, 1
      %vm614 = vcmp.eq.s32.totalorder %v597, 1
      %vm615 = vcmp.eq.s32.totalorder %v600, 1
      %vm616 = vcmp.eq.s32.totalorder %v603, 1
      %vm617 = vcmp.eq.s32.totalorder %v606, 1
      %vm618 = vcmp.eq.s32.totalorder %v609, 1
      %v619 = vsel %vm610, %v556, 0.0
      %v620 = vsel %vm611, %v557, 0.0
      %v621 = vsel %vm612, %v558, 0.0
      %v622 = vsel %vm613, %v559, 0.0
      %v623 = vsel %vm614, %v560, 0.0
      %v624 = vsel %vm615, %v561, 0.0
      %v625 = vsel %vm616, %v562, 0.0
      %v626 = vsel %vm617, %v563, 0.0
      %v627 = vsel %vm618, %v564, 0.0
      %v628 = vadd.f32 %v495, %v619
      %v629 = vadd.f32 %v496, %v620
      %v630 = vadd.f32 %v497, %v621
      %v631 = vadd.f32 %v498, %v622
      %v632 = vadd.f32 %v499, %v623
      %v633 = vadd.f32 %v500, %v624
      %v634 = vadd.f32 %v501, %v625
      %v635 = vadd.f32 %v502, %v626
      %v636 = vadd.f32 %v503, %v627
      %vm637 = vcmp.lt.s32.totalorder %v289, 0
      %vm638 = vcmp.lt.s32.totalorder %v290, 0
      %vm639 = vcmp.lt.s32.totalorder %v291, 0
      %vm640 = vcmp.lt.s32.totalorder %v292, 0
      %vm641 = vcmp.lt.s32.totalorder %v293, 0
      %vm642 = vcmp.lt.s32.totalorder %v294, 0
      %vm643 = vcmp.lt.s32.totalorder %v295, 0
      %vm644 = vcmp.lt.s32.totalorder %v296, 0
      %vm645 = vcmp.lt.s32.totalorder %v297, 0
      %v646 = vsel %vm637, 1, 0
      %v647 = vsel %vm638, 1, 0
      %v648 = vsel %vm639, 1, 0
      %v649 = vsel %vm640, 1, 0
      %v650 = vsel %vm641, 1, 0
      %v651 = vsel %vm642, 1, 0
      %v652 = vsel %vm643, 1, 0
      %v653 = vsel %vm644, 1, 0
      %v654 = vsel %vm645, 1, 0
      %655 = vset.pattern.permute.xlu0 0
      %656 = vperm.xlu0 %655, %v646
      %v657 = vpop.permute.xlu0 %656
      %658 = vset.pattern.permute.xlu0 0
      %659 = vperm.xlu0 %658, %v647
      %v660 = vpop.permute.xlu0 %659
      %661 = vset.pattern.permute.xlu0 0
      %662 = vperm.xlu0 %661, %v648
      %v663 = vpop.permute.xlu0 %662
      %664 = vset.pattern.permute.xlu0 0
      %665 = vperm.xlu0 %664, %v649
      %v666 = vpop.permute.xlu0 %665
      %667 = vset.pattern.permute.xlu0 0
      %668 = vperm.xlu0 %667, %v650
      %v669 = vpop.permute.xlu0 %668
      %670 = vset.pattern.permute.xlu0 0
      %671 = vperm.xlu0 %670, %v651
      %v672 = vpop.permute.xlu0 %671
      %673 = vset.pattern.permute.xlu0 0
      %674 = vperm.xlu0 %673, %v652
      %v675 = vpop.permute.xlu0 %674
      %676 = vset.pattern.permute.xlu0 0
      %677 = vperm.xlu0 %676, %v653
      %v678 = vpop.permute.xlu0 %677
      %679 = vset.pattern.permute.xlu0 0
      %680 = vperm.xlu0 %679, %v654
      %v681 = vpop.permute.xlu0 %680
      %vm682 = vcmp.eq.s32.totalorder %v657, 1
      %vm683 = vcmp.eq.s32.totalorder %v660, 1
      %vm684 = vcmp.eq.s32.totalorder %v663, 1
      %vm685 = vcmp.eq.s32.totalorder %v666, 1
      %vm686 = vcmp.eq.s32.totalorder %v669, 1
      %vm687 = vcmp.eq.s32.totalorder %v672, 1
      %vm688 = vcmp.eq.s32.totalorder %v675, 1
      %vm689 = vcmp.eq.s32.totalorder %v678, 1
      %vm690 = vcmp.eq.s32.totalorder %v681, 1
      %v691 = vperm.slane %v288, 0
      %v692 = vsel %vm682, %v691, %v628
      %v693 = vsel %vm683, %v691, %v629
      %v694 = vsel %vm684, %v691, %v630
      %v695 = vsel %vm685, %v691, %v631
      %v696 = vsel %vm686, %v691, %v632
      %v697 = vsel %vm687, %v691, %v633
      %v698 = vsel %vm688, %v691, %v634
      %v699 = vsel %vm689, %v691, %v635
      %v700 = vsel %vm690, %v691, %v636
      %701 = vst [vmem:[%s259] sm:$0xff] %v692
      %702 = vst [vmem:[%s259 + $0x8] sm:$0xff] %v693
      %703 = vst [vmem:[%s259 + $0x10] sm:$0xff] %v694
      %704 = vst [vmem:[%s259 + $0x18] sm:$0xff] %v695
      %705 = vst [vmem:[%s259 + $0x20] sm:$0xff] %v696
      %706 = vst [vmem:[%s259 + $0x28] sm:$0xff] %v697
      %707 = vst [vmem:[%s259 + $0x30] sm:$0xff] %v698
      %708 = vst [vmem:[%s259 + $0x38] sm:$0xff] %v699
      %709 = vst [vmem:[%s259 + $0x40] sm:$0x1] %v700
      %p710 = scmp.lt.s32.totalorder %s20, 1
      %s711 = scalar_select %p710, %s20, 1
      %p712 = scmp.lt.s32.totalorder %s19, 0
      %s713 = scalar_select %p712, %s19, 0
      %s714 = smul.addr %s711, 9
      %s715 = sadd.s32 %s713, %s714
      %s716 = smul.addr %s715, 8
      %s717 = scalar_lea.vmem %s4, %s716
      // Predicated region
      $region37: #{tpu_custom_call.1} parent=35 // pred_check
        %p718 = pneg %p148
      $region38: #{tpu_custom_call.1} parent=35 // pred_check_branch
        %720 = sbr.rel (%p718) target = $region40
      $region39: #{tpu_custom_call.1} parent=35 // pred_region
        _
      $region40: #{tpu_custom_call.1} parent=35 // pred_fallthru
        _
    $region36: #{tpu_custom_call.1} parent=5 // pred_fallthru
      _
    %p721 = scmp.le.s32.totalorder 2, %s10
    // Predicated region
    $region41: #{tpu_custom_call.1} parent=5 // pred_check
      %p722 = pneg %p721
    $region42: #{tpu_custom_call.1} parent=5 // pred_check_branch
      %724 = sbr.rel (%p722) target = $region44
    $region43: #{tpu_custom_call.1} parent=5 // pred_region
      %s725 = ssub.s32 %s10, 2
      // Predicated region
      $region45: #{tpu_custom_call.1} parent=43 // pred_check
        %p726 = pneg %p154
      $region46: #{tpu_custom_call.1} parent=43 // pred_check_branch
        %728 = sbr.rel (%p726) target = $region48
      $region47: #{tpu_custom_call.1} parent=43 // pred_region
        %p729 = scmp.lt.s32.totalorder %s22, 1
        %s730 = scalar_select %p729, %s22, 1
        %p731 = scmp.lt.s32.totalorder %s21, 0
        %s732 = scalar_select %p731, %s21, 0
        %s733 = smul.addr %s730, 9
        %s734 = sadd.s32 %s732, %s733
        %s735 = smul.addr %s734, 8
        %s736 = scalar_lea.vmem %s4, %s735
      $region48: #{tpu_custom_call.1} parent=43 // pred_fallthru
        _
    $region44: #{tpu_custom_call.1} parent=5 // pred_fallthru
      _
  $region6: #{tpu_custom_call.1} parent=0 // loop_footer
    %s14 = sadd.s32 1, %s10
  $region7: #{tpu_custom_call.1} parent=0 // loop_footer_branch
    %9 = sbr.rel target = $region3
  $region8: #{tpu_custom_call.1} parent=0 // loop_exit
    _

</llo_original>
